<compile_context>
chip_gen: v7x
topology: tpu7x:2x2x1
jax: 0.10.0
libtpu: 0.0.40
codegen_flags: <defaults>
</compile_context>

<pallas_src>
import functools

import jax
import jax.numpy as jnp
from jax.experimental import pallas as pl
from jax.experimental.pallas import tpu as pltpu


def _round_up(n, m):
    return ((n + m - 1) // m) * m


def _dropout_threshold(p):
    # keep iff uint32 bits >= threshold  -> P(keep) = 1 - p
    return min(int(p * (2 ** 32)), (2 ** 32) - 1)


def _svm_eval_kernel(x_ref, w_ref, b_ref, o_ref):
    # out = x @ W_t + b   (nn.Dropout is identity in eval mode)
    acc = jnp.dot(x_ref[...], w_ref[...], preferred_element_type=jnp.float32)
    o_ref[...] = (acc + b_ref[...]).astype(o_ref.dtype)


def _svm_train_kernel(x_ref, w_ref, b_ref, bits_ref, o_ref, *, p):
    # out = inverted_dropout(x @ W_t + b, rate=p)
    acc = jnp.dot(x_ref[...], w_ref[...], preferred_element_type=jnp.float32)
    acc = acc + b_ref[...]
    keep = bits_ref[...] >= jnp.uint32(_dropout_threshold(p))
    scale = jnp.float32(1.0 / (1.0 - p))
    o_ref[...] = jnp.where(keep, acc * scale, jnp.float32(0.0)).astype(o_ref.dtype)


def svm_forward(x, w, b, *, training=False, dropout_p=0.3, rng_key=None,
                block_b=512):
    """SVM.forward: dropout(fc(x)).

    x: (B, D) f32, w: (C, D) (PyTorch nn.Linear layout), b: (C,) -> (B, C).
    """
    B, D = x.shape
    C = w.shape[0]

    # Lane-dense output: pad the class dim to a multiple of 128 lanes.
    C_pad = _round_up(C, 128)
    w_t = jnp.zeros((D, C_pad), dtype=w.dtype).at[:, :C].set(w.T)
    b_pad = jnp.zeros((1, C_pad), dtype=b.dtype).at[0, :C].set(b)

    # Batch tile: big enough to pipeline, tiny in VMEM (D and C_pad are small),
    # so it comfortably fits v7x's 64 MiB VMEM even double-buffered.
    TB = min(B, block_b)
    if TB < B:
        TB = max(8, (TB // 8) * 8)
    grid = (pl.cdiv(B, TB),)

    x_spec = pl.BlockSpec((TB, D), lambda i: (i, 0))
    w_spec = pl.BlockSpec((D, C_pad), lambda i: (0, 0))      # resident across steps
    b_spec = pl.BlockSpec((1, C_pad), lambda i: (0, 0))      # resident across steps
    o_spec = pl.BlockSpec((TB, C_pad), lambda i: (i, 0))
    out_shape = jax.ShapeDtypeStruct((B, C_pad), x.dtype)
    cparams = pltpu.CompilerParams(dimension_semantics=("parallel",))

    if not training:
        out_pad = pl.pallas_call(
            _svm_eval_kernel,
            out_shape=out_shape,
            grid=grid,
            in_specs=[x_spec, w_spec, b_spec],
            out_specs=o_spec,
            compiler_params=cparams,
        )(x, w_t, b_pad)
        return out_pad[:, :C]

    if rng_key is None:
        rng_key = jax.random.PRNGKey(0)
    bits = jax.random.bits(rng_key, (B, C_pad), dtype=jnp.uint32)
    bits_spec = pl.BlockSpec((TB, C_pad), lambda i: (i, 0))

    kernel = functools.partial(_svm_train_kernel, p=float(dropout_p))
    out_pad = pl.pallas_call(
        kernel,
        out_shape=out_shape,
        grid=grid,
        in_specs=[x_spec, w_spec, b_spec, bits_spec],
        out_specs=o_spec,
        compiler_params=cparams,
    )(x, w_t, b_pad, bits)
    return out_pad[:, :C]


if __name__ == "__main__":
    key = jax.random.PRNGKey(0)
    kx, kw, kb, kd = jax.random.split(key, 4)

    batch = 64
    input_dim = 32
    num_classes = 16

    x = jax.random.normal(kx, (batch, input_dim), dtype=jnp.float32)
    # nn.Linear(input_dim, num_classes): weight (C, D), bias (C,) with
    # uniform(-1/sqrt(D), 1/sqrt(D)) init.
    bound = 1.0 / (input_dim ** 0.5)
    w = jax.random.uniform(kw, (num_classes, input_dim),
                           minval=-bound, maxval=bound, dtype=jnp.float32)
    b = jax.random.uniform(kb, (num_classes,),
                           minval=-bound, maxval=bound, dtype=jnp.float32)

    # Eval path (dropout == identity). block_b=16 -> grid of 4 batch tiles.
    out = jax.block_until_ready(svm_forward(x, w, b, training=False, block_b=16))
    ref = x @ w.T + b[None, :]
    assert out.shape == (batch, num_classes)
    assert jnp.allclose(out, ref, atol=1e-5, rtol=1e-5)

    # Training path: inverted dropout with p=0.3 driven by external uint32 bits.
    p = 0.3
    out_tr = jax.block_until_ready(
        svm_forward(x, w, b, training=True, dropout_p=p, rng_key=kd, block_b=16))
    C_pad = _round_up(num_classes, 128)
    bits = jax.random.bits(kd, (batch, C_pad), dtype=jnp.uint32)[:, :num_classes]
    keep = bits >= jnp.uint32(_dropout_threshold(p))
    ref_tr = jnp.where(keep, ref / (1.0 - p), 0.0)
    assert out_tr.shape == (batch, num_classes)
    assert jnp.allclose(out_tr, ref_tr, atol=1e-5, rtol=1e-5)

    print("KERNEL_OK")
</pallas_src>

<mosaic_0001>
module attributes {stable_mosaic.version = 11 : i64} {
  func.func @_svm_eval_kernel(%arg0: i32, %arg1: memref<16x32xf32, #tpu.memory_space<vmem>>, %arg2: memref<32x128xf32, #tpu.memory_space<vmem>>, %arg3: memref<1x128xf32, #tpu.memory_space<vmem>>, %arg4: memref<16x128xf32, #tpu.memory_space<vmem>>) attributes {dimension_semantics = [#tpu.dimension_semantics<parallel>], iteration_bounds = array<i64: 4>, scalar_prefetch = 0 : i64, scratch_operands = 0 : i64, tpu.core_type = #tpu.core_type<tc>, window_params = [{transform_indices = @transform_0, window_bounds = array<i64: 16, 32>}, {pipeline_mode = #tpu.pipeline_mode<synchronous>, transform_indices = @transform_1, window_bounds = array<i64: 32, 128>}, {pipeline_mode = #tpu.pipeline_mode<synchronous>, transform_indices = @transform_2, window_bounds = array<i64: 1, 128>}, {transform_indices = @transform_3, window_bounds = array<i64: 16, 128>}]} {
    %c0 = arith.constant 0 : index
    %c0_0 = arith.constant 0 : index
    %0 = vector.load %arg1[%c0, %c0_0] : memref<16x32xf32, #tpu.memory_space<vmem>>, vector<16x32xf32>
    %c0_1 = arith.constant 0 : index
    %c0_2 = arith.constant 0 : index
    %1 = vector.load %arg2[%c0_1, %c0_2] : memref<32x128xf32, #tpu.memory_space<vmem>>, vector<32x128xf32>
    %cst = arith.constant dense<0.000000e+00> : vector<16x128xf32>
    %2 = tpu.matmul %0, %1, %cst {dimension_numbers = #tpu.dot_dimension_numbers<[1], [0], [0], [1], [0, 0, 1, 1], [], []>} : vector<16x32xf32>, vector<32x128xf32>, vector<16x128xf32> -> vector<16x128xf32>
    %c0_3 = arith.constant 0 : index
    %c0_4 = arith.constant 0 : index
    %3 = vector.load %arg3[%c0_3, %c0_4] : memref<1x128xf32, #tpu.memory_space<vmem>>, vector<1x128xf32>
    %4 = vector.broadcast %3 : vector<1x128xf32> to vector<16x128xf32>
    %5 = arith.addf %2, %4 : vector<16x128xf32>
    %c0_5 = arith.constant 0 : index
    %c0_6 = arith.constant 0 : index
    %6 = vector.load %arg4[%c0_5, %c0_6] : memref<16x128xf32, #tpu.memory_space<vmem>>, vector<16x128xf32>
    tpu.vector_store %arg4[%c0_5, %c0_6], %5 {strides = array<i32>} : memref<16x128xf32, #tpu.memory_space<vmem>>, vector<16x128xf32>,
    return
  }
  func.func @transform_0(%arg0: i32) -> (i32, i32) {
    %c0_i32 = arith.constant 0 : i32
    %c0_i32_0 = arith.constant 0 : i32
    return %arg0, %c0_i32 : i32, i32
  }
  func.func @transform_1(%arg0: i32) -> (i32, i32) {
    %c0_i32 = arith.constant 0 : i32
    %c0_i32_0 = arith.constant 0 : i32
    %c0_i32_1 = arith.constant 0 : i32
    return %c0_i32, %c0_i32_0 : i32, i32
  }
  func.func @transform_2(%arg0: i32) -> (i32, i32) {
    %c0_i32 = arith.constant 0 : i32
    %c0_i32_0 = arith.constant 0 : i32
    %c0_i32_1 = arith.constant 0 : i32
    return %c0_i32, %c0_i32_0 : i32, i32
  }
  func.func @transform_3(%arg0: i32) -> (i32, i32) {
    %c0_i32 = arith.constant 0 : i32
    %c0_i32_0 = arith.constant 0 : i32
    return %arg0, %c0_i32 : i32, i32
  }
}

</mosaic_0001>

<llo_original>
// kernel: tpu_custom_call.1
$region0: #{tpu_custom_call.1}
  #allocation0 [shape = 'u32[]', space=smem, size = 0x4, offset = 0x4, fixed_abs, tag = 'smem constant byte address 0x4 - core index']
  #allocation1 [shape = 'u32[144,128]{1,0:T(1,128)}', space=vmem, size = 0x12000, scoped, tag = 'internal scratch']
  %s0 = inlined_call_operand.vmem [shape: f32[64,32], index: 0, kind: input, shape index: {}]
  %s1 = inlined_call_operand.vmem [shape: f32[32,128], index: 1, kind: input, shape index: {}]
  %s2 = inlined_call_operand.vmem [shape: f32[1,128], index: 2, kind: input, shape index: {}]
  %s3 = inlined_call_operand.hbm [shape: f32[64,128], index: 3, kind: output, shape index: {}]
  %s4 = sld [smem:[#allocation0]]
  $region45: #{tpu_custom_call.1} parent=0
    _
  %s6 = ssub.s32 1, %s4
  %s7 = scalar_select 0, %s6, %s4
  $region1: #{tpu_custom_call.1} parent=0
    #allocation2 [shape = 'u8[16384]{0}', space=vmem, size = 0x4000, scoped, tag = 'output window, operand 0']
    #allocation3 [shape = 's32[2]{0}', space=sflag, size = 0x8, scoped, tag = 'scoped memory for tpu_custom_call.1']
    %8 = vsyncpa [#allocation3], 0
    %s9 = scalar_lea.sflag [#allocation3], 1
    %10 = vsyncpa %s9, 0
    loop: start=0, step=1, limit=6
    $region2: #{tpu_custom_call.1} parent=1 // loop_pre_header
      _
    $region3: #{tpu_custom_call.1} parent=1 // loop_header
      %s12 = sphi 0, %s16
      %p13 = scmp.ge.s32.totalorder %s12, 6
      %s22 = sphi 0, %s24
      %s25 = sphi 0, %s22
      %s26 = sphi 0, %s25
      %s42 = sphi 0, %s26
      %s46 = sphi 0, %s46
      %s48 = sphi 0, %s46
      %s49 = sphi 0, %s48
      %s63 = sphi 0, %s49
      %s67 = sphi 0, %s67
      %s69 = sphi 0, %s67
      %s70 = sphi 0, %s69
      %s84 = sphi 0, %s70
      %s90 = sphi 0, %s92
      %s93 = sphi 0, %s90
      %s94 = sphi 0, %s93
      %s110 = sphi 0, %s94
    $region4: #{tpu_custom_call.1} parent=1 // loop_header_branch
      %15 = sbr.rel (%p13) target = $region8
    $region5: #{tpu_custom_call.1} parent=1 // loop_body
      %s17 = ssub.s32 %s12, 1
      %s18 = ssub.s32 %s12, 2
      %s19 = sadd.s32 %s12, 1
      %s20 = ssub.s32 %s12, %s19
      %p21 = scmp.eq.s32.totalorder %s20, 0
      %s23 = sadd.s32 %s22, 1
      %s24 = scalar_select %p21, %s22, %s23
      %p27 = pneg %p21
      %p28 = scmp.eq.s32.totalorder %s12, 3
      %p29 = por %p27, %p28
      %p30 = scmp.ne.s32.totalorder %s22, %s25
      %p31 = scmp.eq.s32.totalorder %s12, 0
      %p32 = por %p30, %p31
      %p33 = scmp.ne.s32.totalorder %s22, %s25
      %p34 = scmp.eq.s32.totalorder %s17, 3
      %p35 = por %p33, %p34
      %p36 = scmp.ne.s32.totalorder %s25, %s26
      %p37 = scmp.eq.s32.totalorder %s17, 0
      %p38 = por %p36, %p37
      %p39 = scmp.ne.s32.totalorder %s25, %s26
      %p40 = scmp.eq.s32.totalorder %s18, 3
      %p41 = por %p39, %p40
      %p43 = scmp.ne.s32.totalorder %s26, %s42
      %p44 = scmp.eq.s32.totalorder %s18, 0
      %p45 = por %p43, %p44
      %s47 = sadd.s32 %s46, 1
      %p50 = scmp.eq.s32.totalorder %s12, 3
      %p51 = scmp.ne.s32.totalorder %s46, %s48
      %p52 = scmp.eq.s32.totalorder %s12, 0
      %p53 = por %p51, %p52
      %p54 = scmp.ne.s32.totalorder %s46, %s48
      %p55 = scmp.eq.s32.totalorder %s17, 3
      %p56 = por %p54, %p55
      %p57 = scmp.ne.s32.totalorder %s48, %s49
      %p58 = scmp.eq.s32.totalorder %s17, 0
      %p59 = por %p57, %p58
      %p60 = scmp.ne.s32.totalorder %s48, %s49
      %p61 = scmp.eq.s32.totalorder %s18, 3
      %p62 = por %p60, %p61
      %p64 = scmp.ne.s32.totalorder %s49, %s63
      %p65 = scmp.eq.s32.totalorder %s18, 0
      %p66 = por %p64, %p65
      %s68 = sadd.s32 %s67, 1
      %p71 = scmp.eq.s32.totalorder %s12, 3
      %p72 = scmp.ne.s32.totalorder %s67, %s69
      %p73 = scmp.eq.s32.totalorder %s12, 0
      %p74 = por %p72, %p73
      %p75 = scmp.ne.s32.totalorder %s67, %s69
      %p76 = scmp.eq.s32.totalorder %s17, 3
      %p77 = por %p75, %p76
      %p78 = scmp.ne.s32.totalorder %s69, %s70
      %p79 = scmp.eq.s32.totalorder %s17, 0
      %p80 = por %p78, %p79
      %p81 = scmp.ne.s32.totalorder %s69, %s70
      %p82 = scmp.eq.s32.totalorder %s18, 3
      %p83 = por %p81, %p82
      %p85 = scmp.ne.s32.totalorder %s70, %s84
      %p86 = scmp.eq.s32.totalorder %s18, 0
      %p87 = por %p85, %p86
      %s88 = ssub.s32 %s12, %s19
      %p89 = scmp.eq.s32.totalorder %s88, 0
      %s91 = sadd.s32 %s90, 1
      %s92 = scalar_select %p89, %s90, %s91
      %p95 = pneg %p89
      %p96 = scmp.eq.s32.totalorder %s12, 3
      %p97 = por %p95, %p96
      %p98 = scmp.ne.s32.totalorder %s90, %s93
      %p99 = scmp.eq.s32.totalorder %s12, 0
      %p100 = por %p98, %p99
      %p101 = scmp.ne.s32.totalorder %s90, %s93
      %p102 = scmp.eq.s32.totalorder %s17, 3
      %p103 = por %p101, %p102
      %p104 = scmp.ne.s32.totalorder %s93, %s94
      %p105 = scmp.eq.s32.totalorder %s17, 0
      %p106 = por %p104, %p105
      %p107 = scmp.ne.s32.totalorder %s93, %s94
      %p108 = scmp.eq.s32.totalorder %s18, 3
      %p109 = por %p107, %p108
      %p111 = scmp.ne.s32.totalorder %s94, %s110
      %p112 = scmp.eq.s32.totalorder %s18, 0
      %p113 = por %p111, %p112
      %p114 = scmp.le.s32.totalorder 1, %s12
      %p115 = scmp.lt.s32.totalorder %s12, 5
      %p116 = pnand %p114, %p115
      %p117 = pneg %p116
      // Predicated region
      $region9: #{tpu_custom_call.1} parent=5 // pred_check
        _
      $region10: #{tpu_custom_call.1} parent=5 // pred_check_branch
        %119 = sbr.rel (%p116) target = $region12
      $region11: #{tpu_custom_call.1} parent=5 // pred_region
        %s120 = ssub.s32 %s12, 1
        // Predicated region
        $region13: #{tpu_custom_call.1} parent=11 // pred_check
          %p121 = pneg %p59
        $region14: #{tpu_custom_call.1} parent=11 // pred_check_branch
          %123 = sbr.rel (%p121) target = $region16
        $region15: #{tpu_custom_call.1} parent=11 // pred_region
          _
        $region16: #{tpu_custom_call.1} parent=11 // pred_fallthru
          _
        // Predicated region
        $region17: #{tpu_custom_call.1} parent=11 // pred_check
          %p124 = pneg %p80
        $region18: #{tpu_custom_call.1} parent=11 // pred_check_branch
          %126 = sbr.rel (%p124) target = $region20
        $region19: #{tpu_custom_call.1} parent=11 // pred_region
          _
        $region20: #{tpu_custom_call.1} parent=11 // pred_fallthru
          _
      $region12: #{tpu_custom_call.1} parent=5 // pred_fallthru
        _
      %p127 = scmp.lt.s32.totalorder %s12, 4
      // Predicated region
      $region21: #{tpu_custom_call.1} parent=5 // pred_check
        %p128 = pneg %p127
      $region22: #{tpu_custom_call.1} parent=5 // pred_check_branch
        %130 = sbr.rel (%p128) target = $region24
      $region23: #{tpu_custom_call.1} parent=5 // pred_region
        // Predicated region
        $region25: #{tpu_custom_call.1} parent=23 // pred_check
          %p131 = pneg %p32
        $region26: #{tpu_custom_call.1} parent=23 // pred_check_branch
          %133 = sbr.rel (%p131) target = $region28
        $region27: #{tpu_custom_call.1} parent=23 // pred_region
          %s134 = smul.u32 2, %s12
          %p135 = scmp.lt.s32.totalorder %s134, 7
          %s136 = scalar_select %p135, %s134, 7
          %s137 = smul.addr %s136, 8
          %s138 = scalar_lea.vmem %s0, %s137
          %s139 = smul.u32 2, %s12
        $region28: #{tpu_custom_call.1} parent=23 // pred_fallthru
          _
      $region24: #{tpu_custom_call.1} parent=5 // pred_fallthru
        _
      %p140 = scmp.le.s32.totalorder 1, %s12
      %p141 = scmp.lt.s32.totalorder %s12, 5
      %p142 = pnand %p140, %p141
      %p143 = pneg %p142
      // Predicated region
      $region29: #{tpu_custom_call.1} parent=5 // pred_check
        _
      $region30: #{tpu_custom_call.1} parent=5 // pred_check_branch
        %145 = sbr.rel (%p142) target = $region32
      $region31: #{tpu_custom_call.1} parent=5 // pred_region
        %s146 = ssub.s32 %s12, 1
        %s147 = smul.u32 2, %s17
        %p148 = scmp.lt.s32.totalorder %s147, 7
        %s149 = scalar_select %p148, %s147, 7
        %s150 = smul.addr %s149, 8
        %s151 = scalar_lea.vmem %s0, %s150
        %p152 = pneg %p38
        %p153 = pneg %p35
        %p154 = pneg %p59
        %p155 = pneg %p56
        %p156 = pneg %p80
        %p157 = pneg %p77
        %p158 = pneg %p106
        %p159 = pneg %p103
        %s160 = sand.u32 %s93, 1
        %s161 = scalar_lea.sflag [#allocation3], %s160
        %s162 = sand.u32 %s93, 1
        %s163 = smul.addr %s162, 16
        %s164 = scalar_lea.vmem [#allocation2], %s163
        %s165 = smul.u32 2, %s17
        %p166 = scmp.lt.s32.totalorder %s165, 7
        %s167 = scalar_select %p166, %s165, 7
        %s168 = smul.addr %s167, 8
        %s169 = scalar_lea.vmem %s0, %s168
        %s170 = smul.u32 2, %s17
        %s171 = smul.u32 2, %s17
        %v172 = vld [vmem:[%s169] sm:$0xff]
        %v173 = vld [vmem:[%s169 + $0x8] sm:$0xff]
        %v174 = vld [vmem:[%s1] sm:$0xff]
        %v175 = vld [vmem:[%s1 + $0x8] sm:$0xff]
        %v176 = vld [vmem:[%s1 + $0x10] sm:$0xff]
        %v177 = vld [vmem:[%s1 + $0x18] sm:$0xff]
        %v178 = vld [vmem:[%s2] sm:$0x1]
        %v180 = vlaneseq
        %v181 = vshrl.u32 %v180, 7
        %v182 = vsub.s32 0, %v181
        %v183 = vrot.slane %v178, %v182
        %vm185 = vcmask 261120
        %v187 = vsel %vm185, %v172, 0
        %v190 = vsel %vm185, %v173, 0
        %192 = vmatprep.subr.mxu0 0.0
        %193 = vmatpush1.msra.mxu0 %v174
        %194 = vmatprep.subr.mxu0 0.0
        %195 = vmatpush1.msra.mxu0 %v175
        %196 = vmatprep.subr.mxu0 0.0
        %197 = vmatpush1.msra.mxu0 %v176
        %198 = vmatprep.subr.mxu0 0.0
        %199 = vmatpush1.msra.mxu0 %v177
        %200 = vmatprep.subr.mxu0 0.0
        %201 = vmatpush1.msra.mxu0 0.0
        %202 = vmatprep.subr.mxu0 0.0
        %203 = vmatpush1.msra.mxu0 0.0
        %204 = vmatprep.subr.mxu0 0.0
        %205 = vmatpush1.msra.mxu0 0.0
        %206 = vmatprep.subr.mxu0 0.0
        %207 = vmatpush1.msra.mxu0 0.0
        %208 = vmatprep.subr.mxu0 0.0
        %209 = vmatpush1.msra.mxu0 0.0
        %210 = vmatprep.subr.mxu0 0.0
        %211 = vmatpush1.msra.mxu0 0.0
        %212 = vmatprep.subr.mxu0 0.0
        %213 = vmatpush1.msra.mxu0 0.0
        %214 = vmatprep.subr.mxu0 0.0
        %215 = vmatpush1.msra.mxu0 0.0
        %216 = vmatprep.subr.mxu0 0.0
        %217 = vmatpush1.msra.mxu0 0.0
        %218 = vmatprep.subr.mxu0 0.0
        %219 = vmatpush1.msra.mxu0 0.0
        %220 = vmatprep.subr.mxu0 0.0
        %221 = vmatpush1.msra.mxu0 0.0
        %222 = vmatprep.subr.mxu0 0.0
        %223 = vmatpush1.msra.mxu0 0.0
        %224 = vmatprep.subr.mxu0 0.0
        %225 = vmatpush1.msra.mxu0 0.0
        %226 = vmatprep.subr.mxu0 0.0
        %227 = vmatpush1.msra.mxu0 0.0
        %228 = vmatprep.subr.mxu0 0.0
        %229 = vmatpush1.msra.mxu0 0.0
        %230 = vmatprep.subr.mxu0 0.0
        %231 = vmatpush1.msra.mxu0 0.0
        %232 = vmatprep.subr.mxu0 0.0
        %233 = vmatpush1.msra.mxu0 0.0
        %234 = vmatprep.subr.mxu0 0.0
        %235 = vmatpush1.msra.mxu0 0.0
        %236 = vmatprep.subr.mxu0 0.0
        %237 = vmatpush1.msra.mxu0 0.0
        %238 = vmatprep.subr.mxu0 0.0
        %239 = vmatpush1.msra.mxu0 0.0
        %240 = vmatprep.subr.mxu0 0.0
        %241 = vmatpush1.msra.mxu0 0.0
        %242 = vmatprep.subr.mxu0 0.0
        %243 = vmatpush1.msra.mxu0 0.0
        %244 = vmatprep.subr.mxu0 0.0
        %245 = vmatpush1.msra.mxu0 0.0
        %246 = vmatprep.subr.mxu0 0.0
        %247 = vmatpush1.msra.mxu0 0.0
        %248 = vmatprep.subr.mxu0 0.0
        %249 = vmatpush1.msra.mxu0 0.0
        %250 = vmatprep.subr.mxu0 0.0
        %251 = vmatpush1.msra.mxu0 0.0
        %252 = vmatprep.subr.mxu0 0.0
        %253 = vmatpush1.msra.mxu0 0.0
        %254 = vmatprep.subr.mxu0 0.0
        %255 = vmatpush1.msra.mxu0 0.0
        %256 = vmatprep.mubr.f32.mxu0 0.0
        %257 = vmatmul.mubr.f32.gmra.mrb[0].mxu0 %v187
        %v258 = vpop.f32.mrb[0].mxu0
        %v259 = vadd.f32 %v183, %v258
        %v260 = vpop.f32.mrb[0].mxu0
        %261 = vmatprep.mubr.f32.mxu0 0.0
        %262 = vmatmul.mubr.f32.gmra.mrb[0].mxu0 %v190
        %v263 = vpop.f32.mrb[0].mxu0
        %v264 = vadd.f32 %v183, %v263
        %v265 = vpop.f32.mrb[0].mxu0
        %266 = vdwg.mxu0
        %267 = vst [vmem:[%s164] sm:$0xff] %v259
        %268 = vst [vmem:[%s164 + $0x8] sm:$0xff] %v264
        %s269 = sand.u32 %s93, 1
        %s270 = scalar_lea.sflag [#allocation3], %s269
        %s271 = sand.u32 %s93, 1
        %s272 = smul.addr %s271, 16
        %s273 = scalar_lea.vmem [#allocation2], %s272
        // Predicated region
        $region33: #{tpu_custom_call.1} parent=31 // pred_check
          %p274 = pneg %p103
        $region34: #{tpu_custom_call.1} parent=31 // pred_check_branch
          %276 = sbr.rel (%p274) target = $region36
        $region35: #{tpu_custom_call.1} parent=31 // pred_region
          %s277 = smul.u32 2, %s17
          %s279 = ssub.s32 256, 256
          %280 = vsyncadd %s270, %s279
          %s281 = smul.addr %s277, 128
          %s282 = scalar_lea.hbm %s3, %s281
          %s283 = sshll.u32 %s273, 4
          %s284 = int_to_ptr.vmem [resolvable:$true] %s283
          %289 = dma.vmem_to_hbm [thread:$0]  %s284, 256, %s282, %s270, 128, 128, 8
        $region36: #{tpu_custom_call.1} parent=31 // pred_fallthru
          _
      $region32: #{tpu_custom_call.1} parent=5 // pred_fallthru
        _
      %p290 = scmp.le.s32.totalorder 2, %s12
      // Predicated region
      $region37: #{tpu_custom_call.1} parent=5 // pred_check
        %p291 = pneg %p290
      $region38: #{tpu_custom_call.1} parent=5 // pred_check_branch
        %293 = sbr.rel (%p291) target = $region40
      $region39: #{tpu_custom_call.1} parent=5 // pred_region
        %s294 = ssub.s32 %s12, 2
        // Predicated region
        $region41: #{tpu_custom_call.1} parent=39 // pred_check
          %p295 = pneg %p109
        $region42: #{tpu_custom_call.1} parent=39 // pred_check_branch
          %297 = sbr.rel (%p295) target = $region44
        $region43: #{tpu_custom_call.1} parent=39 // pred_region
          %s298 = sand.u32 %s94, 1
          %s299 = scalar_lea.sflag [#allocation3], %s298
          %s300 = sand.u32 %s94, 1
          %s301 = smul.addr %s300, 16
          %s302 = scalar_lea.vmem [#allocation2], %s301
          %303 = dma.done %s299, 256
        $region44: #{tpu_custom_call.1} parent=39 // pred_fallthru
          _
      $region40: #{tpu_custom_call.1} parent=5 // pred_fallthru
        _
    $region6: #{tpu_custom_call.1} parent=1 // loop_footer
      %s16 = sadd.s32 1, %s12
    $region7: #{tpu_custom_call.1} parent=1 // loop_footer_branch
      %11 = sbr.rel target = $region3
    $region8: #{tpu_custom_call.1} parent=1 // loop_exit
      _
    %304 = vsyncpa [#allocation3], 1
    %s305 = scalar_lea.sflag [#allocation3], 1
    %306 = vsyncpa %s305, 1

</llo_original>
